<compile_context>
chip_gen: v7x
topology: tpu7x:2x2x1
jax: 0.10.0
libtpu: 0.0.40
codegen_flags: <defaults>
</compile_context>

<pallas_src>
import functools

import jax
import jax.numpy as jnp
from jax.experimental import pallas as pl
from jax.experimental.pallas import tpu as pltpu

_EPS = 1e-6  # matches F.pairwise_distance default eps


def _contrastive_kernel(x1_ref, x2_ref, lbl_ref, out_ref, acc_ref, *,
                        margin, batch, tile_b):
    """One batch tile.  x1_ref/x2_ref: (D, TB) native dtype; lbl_ref: (1, TB)."""
    i = pl.program_id(0)

    @pl.when(i == 0)
    def _init():
        acc_ref[...] = jnp.zeros_like(acc_ref)

    # Cast in-kernel (inputs arrive in their native dtype; DMA stays narrow).
    x1 = x1_ref[...].astype(jnp.float32)          # (D, TB)
    x2 = x2_ref[...].astype(jnp.float32)          # (D, TB)
    lbl = lbl_ref[...].astype(jnp.float32)        # (1, TB)

    diff = x1 - x2 + _EPS                         # pairwise_distance adds eps to the diff
    d2 = jnp.sum(diff * diff, axis=0, keepdims=True)   # (1, TB) sublane reduce
    d = jnp.sqrt(d2)                                    # euclidean distance per example
    hinge = jnp.maximum(margin - d, 0.0)
    per_example = (1.0 - lbl) * d2 + lbl * (hinge * hinge)   # (1, TB) lane-dense

    # Mask padded tail columns (only needed when B is not a multiple of TB).
    if batch % tile_b != 0:
        col = jax.lax.broadcasted_iota(jnp.int32, per_example.shape, 1)
        valid = (i * tile_b + col) < batch
        per_example = jnp.where(valid, per_example, 0.0)

    acc_ref[...] += jnp.sum(per_example, axis=1, keepdims=True)   # (1, 1)

    @pl.when(i == pl.num_programs(0) - 1)
    def _finalize():
        out_ref[...] = acc_ref[...] * (1.0 / batch)


def contrastive_loss(output1, output2, label, margin=2.0, tile_b=None):
    """output1, output2: (B, D) float (any float dtype); label: (B,). Returns scalar f32."""
    B, D = output1.shape

    # Lane-dense layout plumbing: put batch on the lane (last) axis.
    x1 = jnp.transpose(output1)                  # (D, B), native dtype (no upcast here)
    x2 = jnp.transpose(output2)                  # (D, B)
    if not jnp.issubdtype(label.dtype, jnp.floating):
        label = label.astype(jnp.float32)
    lbl = label.reshape(1, B)

    itemsize = jnp.dtype(output1.dtype).itemsize

    # Tile size over the batch (lane) axis: multiple of 128, ~4 MiB per input tile.
    if tile_b is None:
        target_bytes = 4 << 20
        tb_cap = max(128, (target_bytes // max(1, D * itemsize)) // 128 * 128)
        tb_cap = min(tb_cap, 4096)
    else:
        tb_cap = max(128, (int(tile_b) // 128) * 128)
    tb = B if B <= tb_cap else tb_cap            # full extent if small, else multiple of 128
    num_tiles = pl.cdiv(B, tb)

    # Explicit scoped-VMEM budget: 2 inputs x 2 pipeline buffers + label buffers
    # + in-kernel f32 temporaries, capped at 64 MiB so it is v7x-safe.
    f32_tile = D * tb * 4
    vmem_limit = int(min(
        64 << 20,
        max(32 << 20,
            2 * 2 * D * tb * itemsize + 2 * 2 * tb * 4 + 6 * f32_tile + (4 << 20)),
    ))

    kernel = functools.partial(
        _contrastive_kernel, margin=float(margin), batch=int(B), tile_b=int(tb))

    out = pl.pallas_call(
        kernel,
        out_shape=jax.ShapeDtypeStruct((1, 1), jnp.float32),
        grid_spec=pltpu.PrefetchScalarGridSpec(
            num_scalar_prefetch=0,
            grid=(num_tiles,),
            in_specs=[
                pl.BlockSpec((D, tb), lambda i: (0, i)),
                pl.BlockSpec((D, tb), lambda i: (0, i)),
                pl.BlockSpec((1, tb), lambda i: (0, i)),
            ],
            out_specs=pl.BlockSpec((1, 1), lambda i: (0, 0)),
            scratch_shapes=[pltpu.VMEM((1, 1), jnp.float32)],
        ),
        compiler_params=pltpu.CompilerParams(
            dimension_semantics=("arbitrary",),
            vmem_limit_bytes=vmem_limit,
        ),
    )(x1, x2, lbl)
    return out[0, 0]


def _reference(output1, output2, label, margin=2.0):
    diff = output1.astype(jnp.float32) - output2.astype(jnp.float32) + _EPS
    d = jnp.sqrt(jnp.sum(diff * diff, axis=-1))
    hinge = jnp.clip(margin - d, 0.0, None)
    return jnp.mean((1.0 - label) * d * d + label * hinge * hinge)


if __name__ == "__main__":
    key = jax.random.PRNGKey(0)
    k1, k2, k3 = jax.random.split(key, 3)

    # Small shape consistent with the module's forward: (B, D) embeddings + (B,) labels.
    B, D = 8, 32
    output1 = jax.random.normal(k1, (B, D), dtype=jnp.float32)
    output2 = jax.random.normal(k2, (B, D), dtype=jnp.float32)
    label = jax.random.bernoulli(k3, 0.5, (B,)).astype(jnp.float32)

    loss = jax.block_until_ready(contrastive_loss(output1, output2, label, margin=2.0))
    ref = _reference(output1, output2, label, margin=2.0)
    assert jnp.allclose(loss, ref, rtol=1e-5, atol=1e-5), (loss, ref)

    # Native-dtype (bf16) path: no wrapper upcast, cast happens in-kernel.
    o1b = output1.astype(jnp.bfloat16)
    o2b = output2.astype(jnp.bfloat16)
    loss_b = jax.block_until_ready(contrastive_loss(o1b, o2b, label, margin=2.0))
    ref_b = _reference(o1b.astype(jnp.float32), o2b.astype(jnp.float32), label, 2.0)
    assert jnp.allclose(loss_b, ref_b, rtol=1e-4, atol=1e-4), (loss_b, ref_b)

    # Multi-tile path with tail masking (B not a multiple of the tile).
    B2 = 300
    kk1, kk2, kk3 = jax.random.split(jax.random.PRNGKey(1), 3)
    a1 = jax.random.normal(kk1, (B2, D), dtype=jnp.float32)
    a2 = jax.random.normal(kk2, (B2, D), dtype=jnp.float32)
    lb = jax.random.bernoulli(kk3, 0.5, (B2,)).astype(jnp.float32)
    loss2 = jax.block_until_ready(contrastive_loss(a1, a2, lb, margin=2.0, tile_b=128))
    ref2 = _reference(a1, a2, lb, margin=2.0)
    assert jnp.allclose(loss2, ref2, rtol=1e-5, atol=1e-5), (loss2, ref2)

    print("KERNEL_OK")
</pallas_src>

<mosaic_0001>
module attributes {stable_mosaic.version = 11 : i64} {
  func.func @_contrastive_kernel(%arg0: i32, %arg1: memref<32x8xf32, #tpu.memory_space<vmem>>, %arg2: memref<32x8xf32, #tpu.memory_space<vmem>>, %arg3: memref<1x8xf32, #tpu.memory_space<vmem>>, %arg4: memref<1x1xf32, #tpu.memory_space<vmem>>, %arg5: memref<1x1xf32, #tpu.memory_space<vmem>>) attributes {dimension_semantics = [#tpu.dimension_semantics<arbitrary>], iteration_bounds = array<i64: 1>, scalar_prefetch = 0 : i64, scratch_operands = 1 : i64, tpu.core_type = #tpu.core_type<tc>, window_params = [{transform_indices = @transform_0, window_bounds = array<i64: 32, 8>}, {transform_indices = @transform_1, window_bounds = array<i64: 32, 8>}, {transform_indices = @transform_2, window_bounds = array<i64: 1, 8>}, {pipeline_mode = #tpu.pipeline_mode<synchronous>, transform_indices = @transform_3, window_bounds = array<i64: 1, 1>}]} {
    %c0_i32 = arith.constant 0 : i32
    %0 = arith.cmpi eq, %arg0, %c0_i32 : i32
    %1 = arith.extui %0 : i1 to i32
    %c0_i32_0 = arith.constant 0 : i32
    %2 = arith.cmpi ne, %1, %c0_i32_0 : i32
    scf.if %2 {
      %cst_17 = arith.constant 0.000000e+00 : f32
      %31 = vector.broadcast %cst_17 : f32 to vector<1x1xf32>
      %c0_18 = arith.constant 0 : index
      %c0_19 = arith.constant 0 : index
      %32 = vector.load %arg5[%c0_18, %c0_19] : memref<1x1xf32, #tpu.memory_space<vmem>>, vector<1x1xf32>
      tpu.vector_store %arg5[%c0_18, %c0_19], %31 {strides = array<i32>} : memref<1x1xf32, #tpu.memory_space<vmem>>, vector<1x1xf32>,
    } else {
    }
    %c0 = arith.constant 0 : index
    %c0_1 = arith.constant 0 : index
    %3 = vector.load %arg1[%c0, %c0_1] : memref<32x8xf32, #tpu.memory_space<vmem>>, vector<32x8xf32>
    %c0_2 = arith.constant 0 : index
    %c0_3 = arith.constant 0 : index
    %4 = vector.load %arg2[%c0_2, %c0_3] : memref<32x8xf32, #tpu.memory_space<vmem>>, vector<32x8xf32>
    %c0_4 = arith.constant 0 : index
    %c0_5 = arith.constant 0 : index
    %5 = vector.load %arg3[%c0_4, %c0_5] : memref<1x8xf32, #tpu.memory_space<vmem>>, vector<1x8xf32>
    %6 = arith.subf %3, %4 : vector<32x8xf32>
    %cst = arith.constant 9.99999997E-7 : f32
    %7 = vector.broadcast %cst : f32 to vector<32x8xf32>
    %8 = arith.addf %6, %7 : vector<32x8xf32>
    %9 = arith.mulf %8, %8 : vector<32x8xf32>
    %cst_6 = arith.constant dense<0.000000e+00> : vector<8xf32>
    %10 = vector.multi_reduction <add>, %9, %cst_6 [0] : vector<32x8xf32> to vector<8xf32>
    %11 = vector.shape_cast %10 : vector<8xf32> to vector<1x8xf32>
    %12 = math.sqrt %11 : vector<1x8xf32>
    %cst_7 = arith.constant 2.000000e+00 : f32
    %13 = vector.broadcast %cst_7 : f32 to vector<1x8xf32>
    %14 = arith.subf %13, %12 : vector<1x8xf32>
    %cst_8 = arith.constant 0.000000e+00 : f32
    %15 = vector.broadcast %cst_8 : f32 to vector<1x8xf32>
    %16 = arith.maximumf %14, %15 : vector<1x8xf32>
    %cst_9 = arith.constant 1.000000e+00 : f32
    %17 = vector.broadcast %cst_9 : f32 to vector<1x8xf32>
    %18 = arith.subf %17, %5 : vector<1x8xf32>
    %19 = arith.mulf %18, %11 : vector<1x8xf32>
    %20 = arith.mulf %16, %16 : vector<1x8xf32>
    %21 = arith.mulf %5, %20 : vector<1x8xf32>
    %22 = arith.addf %19, %21 : vector<1x8xf32>
    %c0_10 = arith.constant 0 : index
    %c0_11 = arith.constant 0 : index
    %23 = vector.load %arg5[%c0_10, %c0_11] : memref<1x1xf32, #tpu.memory_space<vmem>>, vector<1x1xf32>
    %cst_12 = arith.constant dense<0.000000e+00> : vector<1xf32>
    %24 = vector.multi_reduction <add>, %22, %cst_12 [1] : vector<1x8xf32> to vector<1xf32>
    %25 = vector.shape_cast %24 : vector<1xf32> to vector<1x1xf32>
    %26 = arith.addf %23, %25 : vector<1x1xf32>
    %c0_13 = arith.constant 0 : index
    %c0_14 = arith.constant 0 : index
    %27 = vector.load %arg5[%c0_13, %c0_14] : memref<1x1xf32, #tpu.memory_space<vmem>>, vector<1x1xf32>
    tpu.vector_store %arg5[%c0_13, %c0_14], %26 {strides = array<i32>} : memref<1x1xf32, #tpu.memory_space<vmem>>, vector<1x1xf32>,
    %c0_i32_15 = arith.constant 0 : i32
    %28 = arith.cmpi eq, %arg0, %c0_i32_15 : i32
    %29 = arith.extui %28 : i1 to i32
    %c0_i32_16 = arith.constant 0 : i32
    %30 = arith.cmpi ne, %29, %c0_i32_16 : i32
    scf.if %30 {
      %c0_17 = arith.constant 0 : index
      %c0_18 = arith.constant 0 : index
      %31 = vector.load %arg5[%c0_17, %c0_18] : memref<1x1xf32, #tpu.memory_space<vmem>>, vector<1x1xf32>
      %cst_19 = arith.constant 1.250000e-01 : f32
      %32 = vector.broadcast %cst_19 : f32 to vector<1x1xf32>
      %33 = arith.mulf %31, %32 : vector<1x1xf32>
      %c0_20 = arith.constant 0 : index
      %c0_21 = arith.constant 0 : index
      %34 = vector.load %arg4[%c0_20, %c0_21] : memref<1x1xf32, #tpu.memory_space<vmem>>, vector<1x1xf32>
      tpu.vector_store %arg4[%c0_20, %c0_21], %33 {strides = array<i32>} : memref<1x1xf32, #tpu.memory_space<vmem>>, vector<1x1xf32>,
    } else {
    }
    return
  }
  func.func @transform_0(%arg0: i32) -> (i32, i32) {
    %c0_i32 = arith.constant 0 : i32
    %c0_i32_0 = arith.constant 0 : i32
    return %c0_i32, %arg0 : i32, i32
  }
  func.func @transform_1(%arg0: i32) -> (i32, i32) {
    %c0_i32 = arith.constant 0 : i32
    %c0_i32_0 = arith.constant 0 : i32
    return %c0_i32, %arg0 : i32, i32
  }
  func.func @transform_2(%arg0: i32) -> (i32, i32) {
    %c0_i32 = arith.constant 0 : i32
    %c0_i32_0 = arith.constant 0 : i32
    return %c0_i32, %arg0 : i32, i32
  }
  func.func @transform_3(%arg0: i32) -> (i32, i32) {
    %c0_i32 = arith.constant 0 : i32
    %c0_i32_0 = arith.constant 0 : i32
    %c0_i32_1 = arith.constant 0 : i32
    return %c0_i32, %c0_i32_0 : i32, i32
  }
}

</mosaic_0001>

<llo_original>
// kernel: tpu_custom_call.1
$region0: #{tpu_custom_call.1}
  #allocation0 [shape = 'u32[]', space=smem, size = 0x4, offset = 0x4, fixed_abs, tag = 'smem constant byte address 0x4 - core index']
  #allocation1 [shape = 'u32[144,128]{1,0:T(1,128)}', space=vmem, size = 0x12000, scoped, tag = 'internal scratch']
  #allocation2 [shape = 'f32[1,1]{1,0:T(1,128)}', space=vmem, size = 0x200, scoped, tag = 'scratch operand']
  %s0 = inlined_call_operand.vmem [shape: f32[32,8], index: 0, kind: input, shape index: {}]
  %s1 = inlined_call_operand.vmem [shape: f32[32,8], index: 1, kind: input, shape index: {}]
  %s2 = inlined_call_operand.vmem [shape: f32[1,8], index: 2, kind: input, shape index: {}]
  %s3 = inlined_call_operand.hbm [shape: f32[1,1], index: 3, kind: output, shape index: {}]
  %s4 = sld [smem:[#allocation0]]
  $region30: #{tpu_custom_call.1} parent=0
    _
  %s6 = ssub.s32 1, %s4
  %s7 = scalar_select 0, %s6, %s4
  $region1: #{tpu_custom_call.1} parent=0
    #allocation3 [shape = 'u8[512]{0}', space=vmem, size = 0x400, scoped, tag = 'output window, operand 0, single buffered']
    #allocation4 [shape = 's32[1]{0}', space=sflag, size = 0x4, scoped, tag = 'scoped memory for tpu_custom_call.1']
    %8 = vsyncpa [#allocation4], 0
    // Predicated region
    $region2: #{tpu_custom_call.1} parent=1 // pred_check
      _
    $region3: #{tpu_custom_call.1} parent=1 // pred_check_branch
      %10 = sbr.rel (0) target = $region5
    $region4: #{tpu_custom_call.1} parent=1 // pred_region
      _
    $region5: #{tpu_custom_call.1} parent=1 // pred_fallthru
      _
    // Predicated region
    $region6: #{tpu_custom_call.1} parent=1 // pred_check
      _
    $region7: #{tpu_custom_call.1} parent=1 // pred_check_branch
      %12 = sbr.rel (0) target = $region9
    $region8: #{tpu_custom_call.1} parent=1 // pred_region
      _
    $region9: #{tpu_custom_call.1} parent=1 // pred_fallthru
      _
    // Predicated region
    $region10: #{tpu_custom_call.1} parent=1 // pred_check
      _
    $region11: #{tpu_custom_call.1} parent=1 // pred_check_branch
      %14 = sbr.rel (0) target = $region13
    $region12: #{tpu_custom_call.1} parent=1 // pred_region
      _
    $region13: #{tpu_custom_call.1} parent=1 // pred_fallthru
      _
    %p15 = scmp.eq.s32.totalorder 0, 0
    // Predicated region
    $region14: #{tpu_custom_call.1} parent=1 // pred_check
      %p16 = pneg %p15
    $region15: #{tpu_custom_call.1} parent=1 // pred_check_branch
      %18 = sbr.rel (%p16) target = $region17
    $region16: #{tpu_custom_call.1} parent=1 // pred_region
      %vm19 = vcmask 0
      %20 = vst.msk [vmem:[#allocation2] sm:$0x1] %vm19, 0.0
    $region17: #{tpu_custom_call.1} parent=1 // pred_fallthru
      _
    %v21 = vld [vmem:[%s0] sm:$0xff]
    %v22 = vld [vmem:[%s0 + $0x8] sm:$0xff]
    %v23 = vld [vmem:[%s0 + $0x10] sm:$0xff]
    %v24 = vld [vmem:[%s0 + $0x18] sm:$0xff]
    %v25 = vld [vmem:[%s1] sm:$0xff]
    %v26 = vld [vmem:[%s1 + $0x8] sm:$0xff]
    %v27 = vld [vmem:[%s1 + $0x10] sm:$0xff]
    %v28 = vld [vmem:[%s1 + $0x18] sm:$0xff]
    %v29 = vld [vmem:[%s2] sm:$0x1]
    %v30 = vsub.f32 %v21, %v25
    %v31 = vsub.f32 %v22, %v26
    %v32 = vsub.f32 %v23, %v27
    %v33 = vsub.f32 %v24, %v28
    %v34 = vadd.f32 %v30, 1e-06
    %v35 = vadd.f32 %v31, 1e-06
    %v36 = vadd.f32 %v32, 1e-06
    %v37 = vadd.f32 %v33, 1e-06
    %v38 = vmul.f32 %v34, %v34
    %v39 = vmul.f32 %v35, %v35
    %v40 = vmul.f32 %v36, %v36
    %v41 = vmul.f32 %v37, %v37
    %vm42 = vcmask 64512
    %v43 = vsel %vm42, %v38, 0.0
    %v44 = vsel %vm42, %v39, 0.0
    %v45 = vadd.f32 %v43, %v44
    %v46 = vsel %vm42, %v40, 0.0
    %v47 = vadd.f32 %v45, %v46
    %v48 = vsel %vm42, %v41, 0.0
    %v49 = vadd.f32 %v47, %v48
    %v50 = vrot.slane %v49, 4
    %v51 = vadd.f32 %v49, %v50
    %v52 = vrot.slane %v51, 2
    %v53 = vadd.f32 %v51, %v52
    %v54 = vrot.slane %v53, 1
    %v55 = vadd.f32 %v53, %v54
    %v56 = vrsqrt.pop %v55
    %v57 = vmul.f32 %v55, %v56
    %vm58 = vcmp.eq.f32.partialorder %v55, inf
    %v59 = vsel %vm58, %v55, %v57
    %vm60 = vcmp.eq.f32.partialorder %v55, 0.0
    %v61 = vand.u32 %v55, 2147483648
    %v62 = vsel %vm60, %v61, %v59
    %v63 = vsub.f32 2.0, %v62
    %v64 = vmax.f32 %v63, 0.0
    %v65 = vsub.f32 1.0, %v29
    %v66 = vmul.f32 %v65, %v55
    %v67 = vmul.f32 %v64, %v64
    %v68 = vmul.f32 %v29, %v67
    %v69 = vadd.f32 %v66, %v68
    %v70 = vld [vmem:[#allocation2] sm:$0x1]
    %vm71 = vcmask 57344
    %v72 = vsel %vm71, %v69, 0.0
    %73 = vadd.xlane.f32.xlu0 %v72
    %v74 = vpop.xlane.xlu0 %73
    %v75 = vadd.f32 %v70, %v74
    %vm76 = vcmask 0
    %77 = vst.msk [vmem:[#allocation2] sm:$0x1] %vm76, %v75
    // Predicated region
    $region18: #{tpu_custom_call.1} parent=1 // pred_check
      %p78 = pneg %p15
    $region19: #{tpu_custom_call.1} parent=1 // pred_check_branch
      %80 = sbr.rel (%p78) target = $region21
    $region20: #{tpu_custom_call.1} parent=1 // pred_region
      %v81 = vld [vmem:[#allocation2] sm:$0x1]
      %v82 = vmul.f32 %v81, 0.125
      %83 = vst.msk [vmem:[#allocation3] sm:$0x1] %vm76, %v82
    $region21: #{tpu_custom_call.1} parent=1 // pred_fallthru
      _
    // Predicated region
    $region22: #{tpu_custom_call.1} parent=1 // pred_check
      _
    $region23: #{tpu_custom_call.1} parent=1 // pred_check_branch
      %85 = sbr.rel (0) target = $region25
    $region24: #{tpu_custom_call.1} parent=1 // pred_region
      %s87 = ssub.s32 16, 16
      %88 = vsyncadd [#allocation4], %s87
      %s90 = sshll.u32 [#allocation3], 4
      %s91 = int_to_ptr.vmem [resolvable:$true] %s90
      %93 = dma.vmem_to_hbm [thread:$0]  %s91, 16, %s3, [#allocation4]
    $region25: #{tpu_custom_call.1} parent=1 // pred_fallthru
      _
    // Predicated region
    $region26: #{tpu_custom_call.1} parent=1 // pred_check
      _
    $region27: #{tpu_custom_call.1} parent=1 // pred_check_branch
      %95 = sbr.rel (0) target = $region29
    $region28: #{tpu_custom_call.1} parent=1 // pred_region
      %96 = dma.done [#allocation4], 16
    $region29: #{tpu_custom_call.1} parent=1 // pred_fallthru
      _
    %97 = vsyncpa [#allocation4], 1

</llo_original>
